<compile_context>
chip_gen: v5e
topology: v5e:2x2
jax: 0.10.0
libtpu: 0.0.40
codegen_flags: <defaults>
</compile_context>

<pallas_src>
import functools
import math

import jax
import jax.numpy as jnp
from jax import lax
from jax.experimental import pallas as pl
from jax.experimental.pallas import tpu as pltpu


# ---------------------------------------------------------------------------
# Small math helpers.
# ---------------------------------------------------------------------------
def _mm(a, w):
    """MXU matmul: activations cast to the weight dtype (bf16 in the kernel),
    f32 accumulation."""
    return jnp.dot(a.astype(w.dtype), w, preferred_element_type=jnp.float32)


def _silu(v):
    return v * (1.0 / (1.0 + jnp.exp(-v)))


def _softplus(v):
    return jnp.where(v > 20.0, v, jnp.log(1.0 + jnp.exp(jnp.minimum(v, 20.0))))


# ---------------------------------------------------------------------------
# Kernel-side parameter layout (per layer, in this order).
# ---------------------------------------------------------------------------
def _kernel_param_names(meta):
    names = ["w3", "bn_scale", "bn_shift"]
    if meta["has_skip"]:
        names.append("wskip")
    names += ["win", "convw", "convb", "wdtf", "bdt", "wb", "wc",
              "a", "dpar", "wout", "lng", "lnb"]
    return names


def _pack_kernel_layer(lp):
    """Derive the kernel-side parameters from the module parameters:
    bf16 matmul weights, fused dt projection, split/aligned B & C projections,
    pre-negated-exponentiated A."""
    meta = lp["meta"]
    dr, ds_ = meta["dt_rank"], meta["d_state"]
    bf16 = jnp.bfloat16
    kp = dict(meta=meta)
    kp["w3"] = lp["w3"].astype(bf16)                       # (3, din, dout)
    kp["bn_scale"] = lp["bn_scale"]
    kp["bn_shift"] = lp["bn_shift"]
    if meta["has_skip"]:
        kp["wskip"] = lp["wskip"].astype(bf16)
    kp["win"] = lp["win"].astype(bf16)                     # (dout, 2*di)
    kp["convw"] = lp["convw"]                              # (2, 4, di) f32
    kp["convb"] = lp["convb"]                              # (2, 1, di) f32
    # (xa @ wx[:, :dr]) @ wdt  ==  xa @ (wx[:, :dr] @ wdt)  (no nonlinearity).
    kp["wdtf"] = jnp.einsum("dir,drj->dij",
                            lp["wx"][:, :, :dr], lp["wdt"]).astype(bf16)
    kp["bdt"] = lp["bdt"]                                  # (2, 1, di) f32
    kp["wb"] = lp["wx"][:, :, dr:dr + ds_].astype(bf16)    # (2, di, ds)
    kp["wc"] = lp["wx"][:, :, dr + ds_:].astype(bf16)      # (2, di, ds)
    kp["a"] = -jnp.exp(lp["alog"])                         # (2, ds, di) f32
    kp["dpar"] = lp["dpar"]
    kp["wout"] = lp["wout"].astype(bf16)                   # (di, dout)
    kp["lng"] = lp["lng"]
    kp["lnb"] = lp["lnb"]
    return kp


# ---------------------------------------------------------------------------
# Tiling heuristics.
# ---------------------------------------------------------------------------
def _pick_batch_tile(B, L):
    divs = [d for d in range(1, B + 1) if B % d == 0]
    # Cap packed M = Bt*L at 512 rows so per-layer temporaries stay modest.
    cand = [d for d in divs if d * L <= 512] or [1]
    # Keep >= 2 grid tiles when B allows (v7x megacore split over batch).
    pref = [d for d in cand if B // d >= 2]
    pool = pref or cand
    filled = [d for d in pool if d * L >= 256]
    return min(filled) if filled else max(pool)


def _pick_time_chunk(L):
    for t in (8, 4, 2, 1):
        if L % t == 0:
            return t
    return 1


# ---------------------------------------------------------------------------
# pltpu.roll direction self-check (semantics should match jnp.roll; verified
# once at trace time so the kernel stays correct across jax versions — the
# wrap-around rows are masked either way, but payload rows must line up).
# ---------------------------------------------------------------------------
@functools.lru_cache(maxsize=None)
def _pltpu_roll_matches_jnp():
    def k(x_ref, o_ref):
        o_ref[...] = pltpu.roll(x_ref[...], 1, 0)

    x = jnp.arange(8 * 128, dtype=jnp.float32).reshape(8, 128)
    y = pl.pallas_call(k, out_shape=jax.ShapeDtypeStruct((8, 128), jnp.float32))(x)
    return bool(jnp.array_equal(y, jnp.roll(x, 1, axis=0)))


# ---------------------------------------------------------------------------
# The fused kernel: whole layer stack, one pallas_call, grid over batch tiles.
# ---------------------------------------------------------------------------
def _make_fused_kernel(metas, L, Bt, d_state, T, roll_matches_jnp):
    N = Bt * L
    nch = L // T
    n_params = sum(len(_kernel_param_names(m)) for m in metas)

    if roll_matches_jnp:
        def kroll(v, s):
            return pltpu.roll(v, s, 0)
    else:
        def kroll(v, s):
            return pltpu.roll(v, (N - s) % N, 0)

    def kernel(*refs):
        x_ref = refs[0]
        p_refs = refs[1:1 + n_params]
        out_ref = refs[1 + n_params]
        ys_ref, dts_ref, dtx_ref, bs_ref, cs_ref = refs[2 + n_params:]

        # Hoisted once per kernel call (JAX does not CSE broadcast_in_dim):
        # row-within-sequence index and the conv shift masks, shared by layers.
        rl = lax.broadcasted_iota(jnp.int32, (Bt, L, 1), 1).reshape(N, 1)
        m_dn = {s: rl >= s for s in (1, 2, 3)}
        m_up = {s: rl < (L - s) for s in (1, 2, 3)}

        def shift_dn(v, s):        # row (n, t) gets v[n, t - s]; zero-padded
            return jnp.where(m_dn[s], kroll(v, s), 0.0)

        def shift_up(v, s):        # row (n, t) gets v[n, t + s]; zero-padded
            return jnp.where(m_up[s], kroll(v, N - s), 0.0)

        def layer(h, P, meta):
            din = h.shape[1]
            dout, di, ds_ = meta["dout"], meta["d_inner"], d_state

            # ---- EnResBlock: Conv1d(k=3, pad=1) + folded BN + ReLU + skip ---
            xm1, xp1 = shift_dn(h, 1), shift_up(h, 1)
            w3_ref = P["w3"]
            if 3 * din <= 256:     # single matmul, K fills one MXU pass
                hc = _mm(jnp.concatenate([xm1, h, xp1], axis=-1),
                         w3_ref[...].reshape(3 * din, dout))
            else:                  # avoid the (N, 3*din) concat copy
                hc = (_mm(xm1, w3_ref[0]) + _mm(h, w3_ref[1])
                      + _mm(xp1, w3_ref[2]))
            hc = jnp.maximum(hc * P["bn_scale"][...] + P["bn_shift"][...], 0.0)
            x1 = hc + (_mm(h, P["wskip"][...]) if meta["has_skip"] else h)

            # ---- BiMamba ('v2'): fwd + rev selective-scan branches ----------
            xz = _mm(x1, P["win"][...])            # (N, 2*di)
            x_in, z = xz[:, :di], xz[:, di:]

            cw, cb = P["convw"][...], P["convb"][...]
            xc0 = cb[0] + x_in * cw[0, 3:4, :]     # causal depthwise k=4
            xc1 = cb[1] + x_in * cw[1, 3:4, :]     # anti-causal depthwise k=4
            for s in (1, 2, 3):
                xc0 = xc0 + shift_dn(x_in, s) * cw[0, 3 - s:4 - s, :]
                xc1 = xc1 + shift_up(x_in, s) * cw[1, 3 - s:4 - s, :]
            xa0, xa1 = _silu(xc0), _silu(xc1)

            # Per-direction projections (fused dt, lane-aligned B / C), written
            # to scratch so the chunked scan can pl.ds-slice them.
            A = P["a"][...]                        # (2, ds, di), = -exp(A_log)
            bdt = P["bdt"][...]
            for d, xa in ((0, xa0), (1, xa1)):
                dt = _softplus(_mm(xa, P["wdtf"][d]) + bdt[d])     # (N, di)
                dts_ref[d, :, :, 0:di] = dt.reshape(Bt, L, di)
                dtx_ref[d, :, :, 0:di] = (dt * xa).reshape(Bt, L, di)
                bs_ref[d] = _mm(xa, P["wb"][d]).reshape(Bt, L, ds_)
                cs_ref[d] = _mm(xa, P["wc"][d]).reshape(Bt, L, ds_)

            A0 = A[0][None, None]                  # (1, 1, ds, di)
            A1 = A[1][None, None]

            # Chunked serial scan: fwd and rev branches advance in lockstep;
            # per chunk all exp/outer-product/broadcast work is precomputed so
            # the unrolled 8-step body is FMA + one sublane reduce / direction.
            def chunk(k, carry):
                hf, hr = carry
                t0 = pl.multiple_of(k * T, T)
                r0 = pl.multiple_of((nch - 1 - k) * T, T)
                dt_f = dts_ref[0, :, pl.ds(t0, T), 0:di]
                dx_f = dtx_ref[0, :, pl.ds(t0, T), 0:di]
                b_f = bs_ref[0, :, pl.ds(t0, T), :]
                c_f = cs_ref[0, :, pl.ds(t0, T), :]
                dt_r = dts_ref[1, :, pl.ds(r0, T), 0:di]
                dx_r = dtx_ref[1, :, pl.ds(r0, T), 0:di]
                b_r = bs_ref[1, :, pl.ds(r0, T), :]
                c_r = cs_ref[1, :, pl.ds(r0, T), :]

                dA_f = jnp.exp(dt_f[:, :, None, :] * A0)     # (Bt, T, ds, di)
                dA_r = jnp.exp(dt_r[:, :, None, :] * A1)
                bdx_f = b_f[:, :, :, None] * dx_f[:, :, None, :]
                bdx_r = b_r[:, :, :, None] * dx_r[:, :, None, :]
                cb_f = jnp.broadcast_to(c_f[:, :, :, None], dA_f.shape)
                cb_r = jnp.broadcast_to(c_r[:, :, :, None], dA_r.shape)

                yf, yr = [], []
                for j in range(T):                 # unrolled 8-step body
                    jr = T - 1 - j
                    hf = dA_f[:, j] * hf + bdx_f[:, j]
                    yf.append(jnp.sum(hf * cb_f[:, j], axis=1))     # (Bt, di)
                    hr = dA_r[:, jr] * hr + bdx_r[:, jr]
                    yr.append(jnp.sum(hr * cb_r[:, jr], axis=1))
                # One aligned T-row store per direction per chunk.
                ys_ref[0, :, pl.ds(t0, T), 0:di] = jnp.stack(yf, axis=1)
                ys_ref[1, :, pl.ds(r0, T), 0:di] = jnp.stack(yr[::-1], axis=1)
                return hf, hr

            h0 = jnp.zeros((Bt, ds_, di), jnp.float32)
            lax.fori_loop(0, nch, chunk, (h0, h0))

            # Every layer writes columns 0:di of both directions for all rows
            # before this read, so no stale scratch data can leak in.
            yscan = (ys_ref[0, :, :, 0:di] + ys_ref[1, :, :, 0:di]).reshape(N, di)

            dpar = P["dpar"][...]
            y = (yscan + dpar[0] * xa0 + dpar[1] * xa1) * _silu(z)  # shared gate
            m_out = _mm(y, P["wout"][...])                           # (N, dout)

            # LayerNorm(eps=1e-6) then residual add (EnBiMambaLayer.forward).
            mean = jnp.mean(m_out, axis=-1, keepdims=True)
            var = jnp.mean(jnp.square(m_out - mean), axis=-1, keepdims=True)
            ln = (m_out - mean) * lax.rsqrt(var + 1e-6) * P["lng"][...] \
                + P["lnb"][...]
            return x1 + ln

        h = x_ref[...].reshape(N, -1).astype(jnp.float32)
        idx = 0
        for meta in metas:
            names = _kernel_param_names(meta)
            P = {n: p_refs[idx + j] for j, n in enumerate(names)}
            idx += len(names)
            h = layer(h, P, meta)
        out_ref[...] = h.reshape(Bt, L, -1).astype(out_ref.dtype)

    return kernel


def _full_spec(arr):
    zeros = (0,) * arr.ndim
    return pl.BlockSpec(arr.shape, lambda g, _z=zeros: _z)


def enssm_forward_pallas(x, layers, batch_tile=None):
    B, L, din0 = x.shape
    metas = [lp["meta"] for lp in layers]
    dout_last = metas[-1]["dout"]
    d_state = metas[0]["d_state"]
    assert all(m["d_state"] == d_state for m in metas)
    max_di = max(m["d_inner"] for m in metas)

    Bt = batch_tile or _pick_batch_tile(B, L)
    assert B % Bt == 0
    T = _pick_time_chunk(L)

    packed = [_pack_kernel_layer(lp) for lp in layers]
    flat = []
    for kp in packed:
        flat += [kp[n] for n in _kernel_param_names(kp["meta"])]

    kernel = _make_fused_kernel(metas, L, Bt, d_state, T,
                                _pltpu_roll_matches_jnp())

    in_specs = [pl.BlockSpec((Bt, L, din0), lambda g: (g, 0, 0))]
    in_specs += [_full_spec(a) for a in flat]

    scratch = [
        pltpu.VMEM((2, Bt, L, max_di), jnp.float32),    # scan outputs (fwd/rev)
        pltpu.VMEM((2, Bt, L, max_di), jnp.float32),    # dt
        pltpu.VMEM((2, Bt, L, max_di), jnp.float32),    # dt * x
        pltpu.VMEM((2, Bt, L, d_state), jnp.float32),   # B
        pltpu.VMEM((2, Bt, L, d_state), jnp.float32),   # C
    ]

    # Explicit VMEM budget: double-buffered params + in/out blocks + scratch
    # + slack for activation temporaries, clamped to [32, 64] MiB.
    param_bytes = sum(int(a.size) * a.dtype.itemsize for a in flat)
    io_bytes = Bt * L * (din0 + dout_last) * 4
    scr_bytes = sum(2 * Bt * L * n * 4
                    for n in (max_di, max_di, max_di, d_state, d_state))
    est = 2 * param_bytes + 2 * io_bytes + scr_bytes + (8 << 20)
    vmem_limit = int(min(64 << 20, max(32 << 20, est)))

    return pl.pallas_call(
        kernel,
        out_shape=jax.ShapeDtypeStruct((B, L, dout_last), jnp.float32),
        grid=(B // Bt,),
        in_specs=in_specs,
        out_specs=pl.BlockSpec((Bt, L, dout_last), lambda g: (g, 0, 0)),
        scratch_shapes=scratch,
        compiler_params=pltpu.CompilerParams(
            dimension_semantics=("parallel",),
            vmem_limit_bytes=vmem_limit),
    )(x, *flat)


# ---------------------------------------------------------------------------
# Pure-JAX reference, written independently from the original (unfused)
# parameters: wx/wdt slicing, per-direction lax.scan recurrence, f32 matmuls.
# ---------------------------------------------------------------------------
def _ref_layer(u, lp):
    meta = lp["meta"]
    L = u.shape[0]
    di, ds_, dr = meta["d_inner"], meta["d_state"], meta["dt_rank"]
    ridx = jnp.arange(L)[:, None]

    def sdn(v, s):
        return jnp.where(ridx >= s, jnp.roll(v, s, axis=0), 0.0)

    def sup(v, s):
        return jnp.where(ridx < L - s, jnp.roll(v, -s, axis=0), 0.0)

    w3 = lp["w3"]
    h = sdn(u, 1) @ w3[0] + u @ w3[1] + sup(u, 1) @ w3[2]
    h = jnp.maximum(h * lp["bn_scale"] + lp["bn_shift"], 0.0)
    x1 = h + (u @ lp["wskip"] if meta["has_skip"] else u)

    xz = x1 @ lp["win"]
    x_in, z = xz[:, :di], xz[:, di:]
    cw, cb = lp["convw"], lp["convb"]
    xc0 = cb[0] + x_in * cw[0, 3]
    xc1 = cb[1] + x_in * cw[1, 3]
    for s in (1, 2, 3):
        xc0 = xc0 + sdn(x_in, s) * cw[0, 3 - s]
        xc1 = xc1 + sup(x_in, s) * cw[1, 3 - s]
    xa0 = xc0 * jax.nn.sigmoid(xc0)
    xa1 = xc1 * jax.nn.sigmoid(xc1)

    def branch(xa, d, reverse):
        dbc = xa @ lp["wx"][d]
        dt = jax.nn.softplus(dbc[:, :dr] @ lp["wdt"][d] + lp["bdt"][d])
        Bm, Cm = dbc[:, dr:dr + ds_], dbc[:, dr + ds_:]
        A = -jnp.exp(lp["alog"][d])
        xs = xa
        if reverse:
            dt, Bm, Cm, xs = dt[::-1], Bm[::-1], Cm[::-1], xs[::-1]

        def step(hprev, inp):
            dt_t, b_t, c_t, x_t = inp
            hn = (jnp.exp(dt_t[None, :] * A) * hprev
                  + b_t[:, None] * (dt_t * x_t)[None, :])
            return hn, jnp.sum(hn * c_t[:, None], axis=0)

        _, ys = lax.scan(step, jnp.zeros((ds_, di), jnp.float32),
                         (dt, Bm, Cm, xs))
        return ys[::-1] if reverse else ys

    yscan = branch(xa0, 0, False) + branch(xa1, 1, True)
    y = (yscan + lp["dpar"][0] * xa0 + lp["dpar"][1] * xa1) \
        * (z * jax.nn.sigmoid(z))
    m = y @ lp["wout"]
    mean = m.mean(-1, keepdims=True)
    var = jnp.square(m - mean).mean(-1, keepdims=True)
    ln = (m - mean) * lax.rsqrt(var + 1e-6) * lp["lng"] + lp["lnb"]
    return x1 + ln


def enssm_forward_ref(x, layers):
    out = x.astype(jnp.float32)
    for lp in layers:
        out = jnp.stack([_ref_layer(out[b], lp) for b in range(out.shape[0])])
    return out


# ---------------------------------------------------------------------------
# Deterministic parameter construction (shapes follow the PyTorch __init__).
# ---------------------------------------------------------------------------
def init_params(key, input_size, output_sizes, d_state=16, d_conv=4, expand=2):
    layers = []
    din = input_size
    for dout in output_sizes:
        d_inner = expand * dout
        dt_rank = max(1, math.ceil(dout / 16))
        keys = jax.random.split(key, 14)
        key = keys[-1]

        # --- EnResBlock ---
        w3 = jax.random.normal(keys[0], (3, din, dout), jnp.float32) \
            * (1.0 / math.sqrt(3 * din))      # taps: [x_{l-1}, x_l, x_{l+1}]
        gamma = 1.0 + 0.1 * jax.random.normal(keys[1], (1, dout), jnp.float32)
        beta = 0.1 * jax.random.normal(keys[2], (1, dout), jnp.float32)
        rmean = 0.05 * jax.random.normal(keys[3], (1, dout), jnp.float32)
        rvar = 1.0 + 0.1 * jnp.abs(jax.random.normal(keys[4], (1, dout), jnp.float32))
        bn_scale = gamma / jnp.sqrt(rvar + 1e-5)
        bn_shift = beta - rmean * bn_scale
        has_skip = din != dout                 # conv is None -> identity skip
        wskip = (jax.random.normal(keys[5], (din, dout), jnp.float32)
                 / math.sqrt(din)) if has_skip else None

        # --- BiMamba ('v2'); fwd/rev branch params stacked along a dim of 2 ---
        win = jax.random.normal(keys[6], (dout, 2 * d_inner), jnp.float32) \
            / math.sqrt(dout)
        convw = 0.5 * jax.random.normal(keys[7], (2, d_conv, d_inner), jnp.float32) \
            / math.sqrt(d_conv)
        convb = 0.1 * jax.random.normal(keys[8], (2, 1, d_inner), jnp.float32)
        wx = jax.random.normal(keys[9], (2, d_inner, dt_rank + 2 * d_state),
                               jnp.float32) / math.sqrt(d_inner)
        wdt = jax.random.normal(keys[10], (2, dt_rank, d_inner), jnp.float32) \
            / math.sqrt(dt_rank)
        bdt = -4.0 + 0.5 * jax.random.normal(keys[11], (2, 1, d_inner), jnp.float32)
        alog = jnp.broadcast_to(
            jnp.log(jnp.arange(1, d_state + 1, dtype=jnp.float32))[None, :, None],
            (2, d_state, d_inner)).astype(jnp.float32)
        dpar = jnp.ones((2, 1, d_inner), jnp.float32)
        wout = jax.random.normal(keys[12], (d_inner, dout), jnp.float32) \
            / math.sqrt(d_inner)
        lng = jnp.ones((1, dout), jnp.float32)
        lnb = jnp.zeros((1, dout), jnp.float32)

        meta = dict(d_inner=d_inner, d_state=d_state, dt_rank=dt_rank,
                    dout=dout, has_skip=has_skip)
        layers.append(dict(
            meta=meta, w3=w3, bn_scale=bn_scale, bn_shift=bn_shift,
            wskip=wskip, win=win, convw=convw, convb=convb, wx=wx, wdt=wdt,
            bdt=bdt, alog=alog, dpar=dpar, wout=wout, lng=lng, lnb=lnb))
        din = dout
    return layers


if __name__ == "__main__":
    key = jax.random.PRNGKey(0)
    # Channel sizes chosen as multiples of 128 so every activation / the output
    # store is lane-dense (channel padding would change LayerNorm semantics).
    B, L, input_size = 4, 8, 32
    output_sizes = [128, 128]

    k_in, k_p = jax.random.split(key)
    x = jax.random.normal(k_in, (B, L, input_size), jnp.float32)
    layers = init_params(k_p, input_size, output_sizes)

    out = jax.block_until_ready(enssm_forward_pallas(x, layers))
    ref = enssm_forward_ref(x, layers)

    assert out.shape == (B, L, output_sizes[-1]), out.shape
    assert bool(jnp.all(jnp.isfinite(out)))
    max_err = float(jnp.max(jnp.abs(out - ref)))
    # Tolerance documents the intentional bf16 MXU operands (f32 accumulation).
    assert bool(jnp.allclose(out, ref, rtol=5e-2, atol=5e-2)), max_err
    print("KERNEL_OK")
</pallas_src>

<mosaic_0001>
module attributes {stable_mosaic.version = 11 : i64} {
  func.func @k(%arg0: memref<8x128xf32, #tpu.memory_space<vmem>>, %arg1: memref<8x128xf32, #tpu.memory_space<vmem>>) attributes {dimension_semantics = [], scalar_prefetch = 0 : i64, scratch_operands = 0 : i64, tpu.core_type = #tpu.core_type<tc>} {
    %c0 = arith.constant 0 : index
    %c0_0 = arith.constant 0 : index
    %0 = vector.load %arg0[%c0, %c0_0] : memref<8x128xf32, #tpu.memory_space<vmem>>, vector<8x128xf32>
    %c1_i32 = arith.constant 1 : i32
    %1 = tpu.dynamic_rotate %0 by %c1_i32 dim 0 : vector<8x128xf32>, i32 -> vector<8x128xf32>
    %c0_1 = arith.constant 0 : index
    %c0_2 = arith.constant 0 : index
    %2 = vector.load %arg1[%c0_1, %c0_2] : memref<8x128xf32, #tpu.memory_space<vmem>>, vector<8x128xf32>
    tpu.vector_store %arg1[%c0_1, %c0_2], %1 {strides = array<i32>} : memref<8x128xf32, #tpu.memory_space<vmem>>, vector<8x128xf32>,
    return
  }
}

</mosaic_0001>

<llo_original>
// kernel: tpu_custom_call.1
$region0: #{tpu_custom_call.1}
  #allocation0 [shape = 'u32[]', space=smem, size = 0x4, offset = 0x4, fixed_abs, tag = 'smem constant byte address 0x4 - core index']
  #allocation1 [shape = 'u32[72,128]{1,0:T(1,128)}', space=vmem, size = 0x9000, scoped, tag = 'internal scratch']
  %s0 = inlined_call_operand.hbm [shape: f32[8,128], index: 0, kind: input, shape index: {}]
  %s1 = inlined_call_operand.hbm [shape: f32[8,128], index: 1, kind: output, shape index: {}]
  %s2 = sld [smem:[#allocation0]]
  $region18: #{tpu_custom_call.1} parent=0
    _
  %s4 = ssub.s32 1, %s2
  %s5 = scalar_select 0, %s4, %s2
  $region1: #{tpu_custom_call.1} parent=0
    #allocation2 [shape = 'u8[4096]{0}', space=vmem, size = 0x1000, scoped, tag = 'input window, operand 0, single buffered']
    #allocation3 [shape = 's32[1]{0}', space=sflag, size = 0x4, scoped, tag = 'scoped memory for tpu_custom_call.1']
    #allocation4 [shape = 's32[1]{0}', space=sflag, size = 0x4, scoped, tag = 'scoped memory for tpu_custom_call.1']
    #allocation5 [shape = 'u8[4096]{0}', space=vmem, size = 0x1000, scoped, tag = 'output window, operand 0, single buffered']
    %6 = vsyncpa [#allocation3], 0
    %7 = vsyncpa [#allocation4], 0
    // Predicated region
    $region2: #{tpu_custom_call.1} parent=1 // pred_check
      _
    $region3: #{tpu_custom_call.1} parent=1 // pred_check_branch
      %9 = sbr.rel (0) target = $region5
    $region4: #{tpu_custom_call.1} parent=1 // pred_region
      %11 = vsyncadd [#allocation3], 0
      %s13 = sshll.u32 %s0, 4
      %s14 = int_to_ptr.hbm [resolvable:$true] %s13
      %s15 = sshll.u32 [#allocation2], 4
      %s16 = int_to_ptr.vmem [resolvable:$true] %s15
      %18 = dma.hbm_to_vmem [thread:$0]  %s14, 128, %s16, [#allocation3]
    $region5: #{tpu_custom_call.1} parent=1 // pred_fallthru
      _
    // Predicated region
    $region6: #{tpu_custom_call.1} parent=1 // pred_check
      _
    $region7: #{tpu_custom_call.1} parent=1 // pred_check_branch
      %20 = sbr.rel (0) target = $region9
    $region8: #{tpu_custom_call.1} parent=1 // pred_region
      %22 = dma.done [#allocation3], 128
    $region9: #{tpu_custom_call.1} parent=1 // pred_fallthru
      _
    %v23 = vld [vmem:[#allocation2] sm:$0xff]
    %v24 = vrot.slane %v23, 7
    %25 = vst [vmem:[#allocation5] sm:$0xff] %v24
    // Predicated region
    $region10: #{tpu_custom_call.1} parent=1 // pred_check
      _
    $region11: #{tpu_custom_call.1} parent=1 // pred_check_branch
      %27 = sbr.rel (0) target = $region13
    $region12: #{tpu_custom_call.1} parent=1 // pred_region
      %29 = vsyncadd [#allocation4], 0
      %s31 = sshll.u32 [#allocation5], 4
      %s32 = int_to_ptr.vmem [resolvable:$true] %s31
      %s33 = sshll.u32 %s1, 4
      %s34 = int_to_ptr.hbm [resolvable:$true] %s33
      %36 = dma.vmem_to_hbm [thread:$0]  %s32, 128, %s34, [#allocation4]
    $region13: #{tpu_custom_call.1} parent=1 // pred_fallthru
      _
    // Predicated region
    $region14: #{tpu_custom_call.1} parent=1 // pred_check
      _
    $region15: #{tpu_custom_call.1} parent=1 // pred_check_branch
      %38 = sbr.rel (0) target = $region17
    $region16: #{tpu_custom_call.1} parent=1 // pred_region
      %40 = dma.done [#allocation4], 128
    $region17: #{tpu_custom_call.1} parent=1 // pred_fallthru
      _
    %41 = vsyncpa [#allocation3], 1
    %42 = vsyncpa [#allocation4], 1

</llo_original>
